<compile_context>
chip_gen: v5e
topology: v5e:2x2
jax: 0.10.0
libtpu: 0.0.40
codegen_flags: <defaults>
</compile_context>

<pallas_src>
import dataclasses
import math
from functools import partial

import jax
import jax.numpy as jnp
from jax.experimental import pallas as pl
from jax.experimental.pallas import tpu as pltpu

_VMEM_BUDGET = 40 << 20   # target live VMEM for a kernel (safe on v7x 64 MiB)
_VMEM_LIMIT = 48 << 20    # scoped limit handed to Mosaic (safe on all gens)


def _round_up(x, m):
    return ((x + m - 1) // m) * m


# ---------------------------------------------------------------------------
# Tiling plan
# ---------------------------------------------------------------------------
@dataclasses.dataclass(frozen=True)
class GCNPlan:
    N: int
    f_in: int
    f_out: int
    n_p: int
    f_in_p: int
    f_out_p: int
    tm: int                # stage-2 row tile
    tk: int                # stage-2 contraction tile (== n_p when flattened)
    tm_s: int              # stage-1 row tile
    support_resident: bool


def make_plan(N, f_in, f_out):
    f_in_p = _round_up(f_in, 128)
    f_out_p = _round_up(f_out, 128)

    # Row tile: 512 preferred for HBM bandwidth; keep >= 2 row tiles so the
    # "parallel" i axis still shards across both v7x TensorCores.
    if _round_up(N, 512) >= 1024:
        tm = 512
        n_p = _round_up(N, 512)
    else:
        tm = 256
        n_p = _round_up(N, 256)
    if n_p // tm < 2 and tm > 128:
        tm //= 2
    assert n_p % tm == 0

    # VMEM accounting (inputs/outputs double-buffered by BlockSpec).
    out_bytes = 2 * tm * f_out_p * 4
    bias_bytes = 2 * f_out_p * 4
    support_res_bytes = 2 * n_p * f_out_p * 2   # bf16, conservatively x2

    def adj_bytes(tk):
        return 2 * tm * tk * 2                  # bf16, double-buffered

    tk = None
    support_resident = True
    # 1) Flatten k entirely: adj row tile spans the full width, one dot/tile.
    if support_res_bytes + adj_bytes(n_p) + out_bytes + bias_bytes <= _VMEM_BUDGET:
        tk = n_p
    # 2) k-tiled, but support stays fully VMEM-resident (read from HBM once).
    if tk is None:
        for cand in (2048, 1024, 512, 256):
            if (cand <= n_p and n_p % cand == 0 and
                    support_res_bytes + adj_bytes(cand) + out_bytes
                    + bias_bytes <= _VMEM_BUDGET):
                tk = cand
                break
    # 3) Fallback: stream support tiles along k as well.
    if tk is None:
        support_resident = False
        for cand in (2048, 1024, 512, 256):
            if (cand <= n_p and n_p % cand == 0 and
                    adj_bytes(cand) + 2 * cand * f_out_p * 2 + out_bytes
                    + bias_bytes <= _VMEM_BUDGET):
                tk = cand
                break
        if tk is None:
            tk = 256
    assert n_p % tk == 0

    # Stage-1 row tile: shrink until its live VMEM fits the budget.
    tm_s = tm
    while tm_s > 128 and (2 * tm_s * f_in_p * 2 + 2 * f_in_p * f_out_p * 2
                          + 2 * tm_s * f_out_p * 2) > _VMEM_BUDGET:
        tm_s //= 2
    assert n_p % tm_s == 0

    return GCNPlan(N, f_in, f_out, n_p, f_in_p, f_out_p,
                   tm, tk, tm_s, support_resident)


def prepare_adjacency(adj, plan, dtype=jnp.bfloat16):
    """One-time pad + cast of the (N, N) adjacency (hoist out of per-layer calls)."""
    N = adj.shape[0]
    pad = plan.n_p - N
    return jnp.pad(adj, ((0, pad), (0, pad))).astype(dtype)


# ---------------------------------------------------------------------------
# Stage 1: support = x @ weight   (tiled over rows; weight resident)
# ---------------------------------------------------------------------------
def _support_kernel(x_ref, w_ref, s_ref):
    s_ref[...] = jnp.dot(
        x_ref[...], w_ref[...], preferred_element_type=jnp.float32
    ).astype(s_ref.dtype)


def _stage1_support(x_bf, w_bf, plan):
    return pl.pallas_call(
        _support_kernel,
        out_shape=jax.ShapeDtypeStruct((plan.n_p, plan.f_out_p), jnp.bfloat16),
        grid_spec=pltpu.PrefetchScalarGridSpec(
            num_scalar_prefetch=0,
            grid=(plan.n_p // plan.tm_s,),
            in_specs=[
                pl.BlockSpec((plan.tm_s, plan.f_in_p), lambda i: (i, 0)),
                pl.BlockSpec((plan.f_in_p, plan.f_out_p), lambda i: (0, 0)),
            ],
            out_specs=pl.BlockSpec((plan.tm_s, plan.f_out_p), lambda i: (i, 0)),
        ),
        compiler_params=pltpu.CompilerParams(
            dimension_semantics=("parallel",),
            vmem_limit_bytes=_VMEM_LIMIT),
        cost_estimate=pl.CostEstimate(
            flops=2 * plan.n_p * plan.f_in_p * plan.f_out_p,
            transcendentals=0,
            bytes_accessed=2 * (plan.n_p * plan.f_in_p
                                + plan.f_in_p * plan.f_out_p
                                + plan.n_p * plan.f_out_p)),
    )(x_bf, w_bf)


# ---------------------------------------------------------------------------
# Stage 2: out = adj @ support + bias
#   * output block is f32 and resident across k -> accumulate directly in it,
#     initialized with the broadcast bias at k == 0 (no scratch accumulator).
#   * when support_resident: support BlockSpec is the whole array at (0, 0)
#     (fetched from HBM once), sliced in-kernel along k.
# ---------------------------------------------------------------------------
def _aggregate_kernel(adj_ref, s_ref, b_ref, o_ref, *, tk, support_resident):
    k = pl.program_id(1)
    if support_resident and tk < s_ref.shape[0]:
        start = pl.multiple_of(k * tk, tk)
        s_blk = s_ref[pl.ds(start, tk), :]
    else:
        s_blk = s_ref[...]
    contrib = jnp.dot(adj_ref[...], s_blk, preferred_element_type=jnp.float32)

    @pl.when(k == 0)
    def _():
        o_ref[...] = contrib + b_ref[...]

    @pl.when(k > 0)
    def _():
        o_ref[...] += contrib


def _stage2_aggregate(adj_bf, support, bias_p, plan):
    if plan.support_resident:
        s_spec = pl.BlockSpec((plan.n_p, plan.f_out_p), lambda i, k: (0, 0))
    else:
        s_spec = pl.BlockSpec((plan.tk, plan.f_out_p), lambda i, k: (k, 0))

    kernel = partial(_aggregate_kernel, tk=plan.tk,
                     support_resident=plan.support_resident)
    return pl.pallas_call(
        kernel,
        out_shape=jax.ShapeDtypeStruct((plan.n_p, plan.f_out_p), jnp.float32),
        grid_spec=pltpu.PrefetchScalarGridSpec(
            num_scalar_prefetch=0,
            grid=(plan.n_p // plan.tm, plan.n_p // plan.tk),
            in_specs=[
                pl.BlockSpec((plan.tm, plan.tk), lambda i, k: (i, k)),   # adj
                s_spec,                                                  # support
                pl.BlockSpec((1, plan.f_out_p), lambda i, k: (0, 0)),    # bias
            ],
            out_specs=pl.BlockSpec((plan.tm, plan.f_out_p), lambda i, k: (i, 0)),
        ),
        compiler_params=pltpu.CompilerParams(
            dimension_semantics=("parallel", "arbitrary"),
            vmem_limit_bytes=_VMEM_LIMIT),
        cost_estimate=pl.CostEstimate(
            flops=2 * plan.n_p * plan.n_p * plan.f_out_p,
            transcendentals=0,
            bytes_accessed=2 * plan.n_p * plan.n_p
                           + 2 * plan.n_p * plan.f_out_p
                           + 4 * plan.n_p * plan.f_out_p
                           + 4 * plan.f_out_p),
    )(adj_bf, support, bias_p)


# ---------------------------------------------------------------------------
# Layer forward: adj @ (x @ weight) + bias
# NOTE: MXU operands are cast to bf16 (f32 accumulation / f32 output); this is
# a documented numeric choice vs the f32 torch reference.
# ---------------------------------------------------------------------------
def graph_convolution(x, adj, weight, bias=None, *, plan=None):
    N, f_in = x.shape
    f_in_w, f_out = weight.shape
    assert f_in_w == f_in
    if plan is None:
        plan = make_plan(N, f_in, f_out)
    assert plan.N == N and plan.f_in == f_in and plan.f_out == f_out

    # Accept either the raw (N, N) adjacency or one already padded/cast by
    # prepare_adjacency() (preferred: do it once, reuse across GCN layers).
    if adj.shape == (plan.n_p, plan.n_p) and adj.dtype == jnp.bfloat16:
        adj_bf = adj
    else:
        assert adj.shape == (N, N)
        adj_bf = prepare_adjacency(adj, plan)

    if bias is None:
        bias = jnp.zeros((f_out,), jnp.float32)

    x_bf = jnp.pad(
        x, ((0, plan.n_p - N), (0, plan.f_in_p - f_in))).astype(jnp.bfloat16)
    w_bf = jnp.pad(
        weight, ((0, plan.f_in_p - f_in), (0, plan.f_out_p - f_out))
    ).astype(jnp.bfloat16)
    b_p = jnp.pad(bias.astype(jnp.float32),
                  (0, plan.f_out_p - f_out)).reshape(1, plan.f_out_p)

    support = _stage1_support(x_bf, w_bf, plan)
    out_p = _stage2_aggregate(adj_bf, support, b_p, plan)
    return out_p[:N, :f_out]


if __name__ == "__main__":
    # N graph nodes, in_features -> out_features; N=512 gives 2 row tiles
    # (megacore-friendly) and exercises the flattened-k / resident-support path.
    N, in_features, out_features = 512, 64, 128

    key = jax.random.PRNGKey(0)
    k_x, k_adj, k_w, k_b = jax.random.split(key, 4)

    x = jax.random.normal(k_x, (N, in_features), dtype=jnp.float32)
    adj = jax.random.uniform(k_adj, (N, N), dtype=jnp.float32)
    adj = adj / jnp.sum(adj, axis=1, keepdims=True)   # row-normalized adjacency

    # reset_parameters(): uniform(-stdv, stdv), stdv = 1/sqrt(out_features).
    stdv = 1.0 / math.sqrt(out_features)
    weight = jax.random.uniform(
        k_w, (in_features, out_features), dtype=jnp.float32,
        minval=-stdv, maxval=stdv)
    bias = jax.random.uniform(
        k_b, (out_features,), dtype=jnp.float32, minval=-stdv, maxval=stdv)

    # Hoisted one-time adjacency pad + bf16 cast (reused across layers/calls).
    plan = make_plan(N, in_features, out_features)
    adj_bf = prepare_adjacency(adj, plan)

    out = graph_convolution(x, adj_bf, weight, bias, plan=plan)
    out = jax.block_until_ready(out)
    assert out.shape == (N, out_features)

    # Reference 1: same bf16-operand / f32-accumulate path as the kernel.
    x_b = x.astype(jnp.bfloat16)
    w_b = weight.astype(jnp.bfloat16)
    s_b = jnp.dot(x_b, w_b, preferred_element_type=jnp.float32).astype(jnp.bfloat16)
    ref_bf = jnp.dot(adj.astype(jnp.bfloat16), s_b,
                     preferred_element_type=jnp.float32) + bias
    assert jnp.allclose(out, ref_bf, atol=1e-4, rtol=1e-4), \
        f"kernel-vs-bf16-path max abs err {jnp.max(jnp.abs(out - ref_bf))}"

    # Reference 2: full-f32 semantic reference (looser tolerance for bf16 inputs).
    ref_f32 = adj @ (x @ weight) + bias
    assert jnp.allclose(out, ref_f32, atol=1e-2, rtol=1e-2), \
        f"kernel-vs-f32 max abs err {jnp.max(jnp.abs(out - ref_f32))}"

    print("KERNEL_OK")
</pallas_src>

<mosaic_0001>
module attributes {stable_mosaic.version = 11 : i64} {
  func.func @_support_kernel(%arg0: i32, %arg1: memref<256x128xbf16, #tpu.memory_space<vmem>>, %arg2: memref<128x128xbf16, #tpu.memory_space<vmem>>, %arg3: memref<256x128xbf16, #tpu.memory_space<vmem>>) attributes {dimension_semantics = [#tpu.dimension_semantics<parallel>], iteration_bounds = array<i64: 2>, scalar_prefetch = 0 : i64, scratch_operands = 0 : i64, tpu.core_type = #tpu.core_type<tc>, window_params = [{transform_indices = @transform_0, window_bounds = array<i64: 256, 128>}, {pipeline_mode = #tpu.pipeline_mode<synchronous>, transform_indices = @transform_1, window_bounds = array<i64: 128, 128>}, {transform_indices = @transform_2, window_bounds = array<i64: 256, 128>}]} {
    %c0 = arith.constant 0 : index
    %c0_0 = arith.constant 0 : index
    %0 = vector.load %arg1[%c0, %c0_0] : memref<256x128xbf16, #tpu.memory_space<vmem>>, vector<256x128xbf16>
    %c0_1 = arith.constant 0 : index
    %c0_2 = arith.constant 0 : index
    %1 = vector.load %arg2[%c0_1, %c0_2] : memref<128x128xbf16, #tpu.memory_space<vmem>>, vector<128x128xbf16>
    %cst = arith.constant dense<0.000000e+00> : vector<256x128xf32>
    %2 = tpu.matmul %0, %1, %cst {dimension_numbers = #tpu.dot_dimension_numbers<[1], [0], [0], [1], [0, 0, 1, 1], [], []>} : vector<256x128xbf16>, vector<128x128xbf16>, vector<256x128xf32> -> vector<256x128xf32>
    %3 = arith.truncf %2 : vector<256x128xf32> to vector<256x128xbf16>
    %c0_3 = arith.constant 0 : index
    %c0_4 = arith.constant 0 : index
    %4 = vector.load %arg3[%c0_3, %c0_4] : memref<256x128xbf16, #tpu.memory_space<vmem>>, vector<256x128xbf16>
    tpu.vector_store %arg3[%c0_3, %c0_4], %3 {strides = array<i32>} : memref<256x128xbf16, #tpu.memory_space<vmem>>, vector<256x128xbf16>,
    return
  }
  func.func @transform_0(%arg0: i32) -> (i32, i32) {
    %c0_i32 = arith.constant 0 : i32
    %c0_i32_0 = arith.constant 0 : i32
    return %arg0, %c0_i32 : i32, i32
  }
  func.func @transform_1(%arg0: i32) -> (i32, i32) {
    %c0_i32 = arith.constant 0 : i32
    %c0_i32_0 = arith.constant 0 : i32
    %c0_i32_1 = arith.constant 0 : i32
    return %c0_i32, %c0_i32_0 : i32, i32
  }
  func.func @transform_2(%arg0: i32) -> (i32, i32) {
    %c0_i32 = arith.constant 0 : i32
    %c0_i32_0 = arith.constant 0 : i32
    return %arg0, %c0_i32 : i32, i32
  }
}

</mosaic_0001>

<llo_original>
// kernel: tpu_custom_call.1
$region0: #{tpu_custom_call.1}
  #allocation0 [shape = 'u32[]', space=smem, size = 0x4, offset = 0x4, fixed_abs, tag = 'smem constant byte address 0x4 - core index']
  #allocation1 [shape = 'u32[72,128]{1,0:T(1,128)}', space=vmem, size = 0x9000, scoped, tag = 'internal scratch']
  %s0 = inlined_call_operand.hbm [shape: bf16[512,128], index: 0, kind: input, shape index: {}]
  %s1 = inlined_call_operand.hbm [shape: bf16[128,128], index: 1, kind: input, shape index: {}]
  %s2 = inlined_call_operand.hbm [shape: bf16[512,128], index: 2, kind: output, shape index: {}]
  %s3 = sld [smem:[#allocation0]]
  $region49: #{tpu_custom_call.1} parent=0
    _
  %s5 = ssub.s32 1, %s3
  %s6 = scalar_select 0, %s5, %s3
  $region1: #{tpu_custom_call.1} parent=0
    #allocation2 [shape = 'u8[131072]{0}', space=vmem, size = 0x20000, scoped, tag = 'input window, operand 0']
    #allocation3 [shape = 's32[2]{0}', space=sflag, size = 0x8, scoped, tag = 'scoped memory for tpu_custom_call.1']
    #allocation4 [shape = 's32[2]{0}', space=sflag, size = 0x8, scoped, tag = 'scoped memory for tpu_custom_call.1']
    #allocation5 [shape = 'u8[32768]{0}', space=vmem, size = 0x8000, scoped, tag = 'input window, operand 1, single buffered']
    #allocation6 [shape = 's32[1]{0}', space=sflag, size = 0x4, scoped, tag = 'scoped memory for tpu_custom_call.1']
    #allocation7 [shape = 'u8[131072]{0}', space=vmem, size = 0x20000, scoped, tag = 'output window, operand 0']
    %7 = vsyncpa [#allocation3], 0
    %s8 = scalar_lea.sflag [#allocation3], 1
    %9 = vsyncpa %s8, 0
    %10 = vsyncpa [#allocation6], 0
    %11 = vsyncpa [#allocation4], 0
    %s12 = scalar_lea.sflag [#allocation4], 1
    %13 = vsyncpa %s12, 0
    loop: start=0, step=1, limit=4
    $region2: #{tpu_custom_call.1} parent=1 // loop_pre_header
      _
    $region3: #{tpu_custom_call.1} parent=1 // loop_header
      %s15 = sphi 0, %s19
      %p16 = scmp.ge.s32.totalorder %s15, 4
      %s25 = sphi 0, %s27
      %s28 = sphi 0, %s25
      %s29 = sphi 0, %s28
      %s45 = sphi 0, %s29
      %s49 = sphi 0, %s49
      %s51 = sphi 0, %s49
      %s52 = sphi 0, %s51
      %s66 = sphi 0, %s52
      %s72 = sphi 0, %s74
      %s75 = sphi 0, %s72
      %s76 = sphi 0, %s75
      %s92 = sphi 0, %s76
    $region4: #{tpu_custom_call.1} parent=1 // loop_header_branch
      %18 = sbr.rel (%p16) target = $region8
    $region5: #{tpu_custom_call.1} parent=1 // loop_body
      %s20 = ssub.s32 %s15, 1
      %s21 = ssub.s32 %s15, 2
      %s22 = sadd.s32 %s15, 1
      %s23 = ssub.s32 %s15, %s22
      %p24 = scmp.eq.s32.totalorder %s23, 0
      %s26 = sadd.s32 %s25, 1
      %s27 = scalar_select %p24, %s25, %s26
      %p30 = pneg %p24
      %p31 = scmp.eq.s32.totalorder %s15, 1
      %p32 = por %p30, %p31
      %p33 = scmp.ne.s32.totalorder %s25, %s28
      %p34 = scmp.eq.s32.totalorder %s15, 0
      %p35 = por %p33, %p34
      %p36 = scmp.ne.s32.totalorder %s25, %s28
      %p37 = scmp.eq.s32.totalorder %s20, 1
      %p38 = por %p36, %p37
      %p39 = scmp.ne.s32.totalorder %s28, %s29
      %p40 = scmp.eq.s32.totalorder %s20, 0
      %p41 = por %p39, %p40
      %p42 = scmp.ne.s32.totalorder %s28, %s29
      %p43 = scmp.eq.s32.totalorder %s21, 1
      %p44 = por %p42, %p43
      %p46 = scmp.ne.s32.totalorder %s29, %s45
      %p47 = scmp.eq.s32.totalorder %s21, 0
      %p48 = por %p46, %p47
      %s50 = sadd.s32 %s49, 1
      %p53 = scmp.eq.s32.totalorder %s15, 1
      %p54 = scmp.ne.s32.totalorder %s49, %s51
      %p55 = scmp.eq.s32.totalorder %s15, 0
      %p56 = por %p54, %p55
      %p57 = scmp.ne.s32.totalorder %s49, %s51
      %p58 = scmp.eq.s32.totalorder %s20, 1
      %p59 = por %p57, %p58
      %p60 = scmp.ne.s32.totalorder %s51, %s52
      %p61 = scmp.eq.s32.totalorder %s20, 0
      %p62 = por %p60, %p61
      %p63 = scmp.ne.s32.totalorder %s51, %s52
      %p64 = scmp.eq.s32.totalorder %s21, 1
      %p65 = por %p63, %p64
      %p67 = scmp.ne.s32.totalorder %s52, %s66
      %p68 = scmp.eq.s32.totalorder %s21, 0
      %p69 = por %p67, %p68
      %s70 = ssub.s32 %s15, %s22
      %p71 = scmp.eq.s32.totalorder %s70, 0
      %s73 = sadd.s32 %s72, 1
      %s74 = scalar_select %p71, %s72, %s73
      %p77 = pneg %p71
      %p78 = scmp.eq.s32.totalorder %s15, 1
      %p79 = por %p77, %p78
      %p80 = scmp.ne.s32.totalorder %s72, %s75
      %p81 = scmp.eq.s32.totalorder %s15, 0
      %p82 = por %p80, %p81
      %p83 = scmp.ne.s32.totalorder %s72, %s75
      %p84 = scmp.eq.s32.totalorder %s20, 1
      %p85 = por %p83, %p84
      %p86 = scmp.ne.s32.totalorder %s75, %s76
      %p87 = scmp.eq.s32.totalorder %s20, 0
      %p88 = por %p86, %p87
      %p89 = scmp.ne.s32.totalorder %s75, %s76
      %p90 = scmp.eq.s32.totalorder %s21, 1
      %p91 = por %p89, %p90
      %p93 = scmp.ne.s32.totalorder %s76, %s92
      %p94 = scmp.eq.s32.totalorder %s21, 0
      %p95 = por %p93, %p94
      %p96 = scmp.le.s32.totalorder 1, %s15
      %p97 = scmp.lt.s32.totalorder %s15, 3
      %p98 = pnand %p96, %p97
      %p99 = pneg %p98
      // Predicated region
      $region9: #{tpu_custom_call.1} parent=5 // pred_check
        _
      $region10: #{tpu_custom_call.1} parent=5 // pred_check_branch
        %101 = sbr.rel (%p98) target = $region12
      $region11: #{tpu_custom_call.1} parent=5 // pred_region
        %s102 = ssub.s32 %s15, 1
        // Predicated region
        $region13: #{tpu_custom_call.1} parent=11 // pred_check
          %p103 = pneg %p62
        $region14: #{tpu_custom_call.1} parent=11 // pred_check_branch
          %105 = sbr.rel (%p103) target = $region16
        $region15: #{tpu_custom_call.1} parent=11 // pred_region
          %107 = vsyncadd [#allocation6], 0
          %s108 = sshll.u32 %s1, 4
          %s109 = int_to_ptr.hbm [resolvable:$true] %s108
          %s110 = sshll.u32 [#allocation5], 4
          %s111 = int_to_ptr.vmem [resolvable:$true] %s110
          %116 = dma.hbm_to_vmem [thread:$0]  %s109, 1024, %s111, [#allocation6], 64, 64, 4
        $region16: #{tpu_custom_call.1} parent=11 // pred_fallthru
          _
      $region12: #{tpu_custom_call.1} parent=5 // pred_fallthru
        _
      %p117 = scmp.lt.s32.totalorder %s15, 2
      // Predicated region
      $region17: #{tpu_custom_call.1} parent=5 // pred_check
        %p118 = pneg %p117
      $region18: #{tpu_custom_call.1} parent=5 // pred_check_branch
        %120 = sbr.rel (%p118) target = $region20
      $region19: #{tpu_custom_call.1} parent=5 // pred_region
        // Predicated region
        $region21: #{tpu_custom_call.1} parent=19 // pred_check
          %p121 = pneg %p35
        $region22: #{tpu_custom_call.1} parent=19 // pred_check_branch
          %123 = sbr.rel (%p121) target = $region24
        $region23: #{tpu_custom_call.1} parent=19 // pred_region
          %s124 = sand.u32 %s25, 1
          %s125 = scalar_lea.sflag [#allocation3], %s124
          %s126 = sand.u32 %s25, 1
          %s127 = smul.addr %s126, 128
          %s128 = scalar_lea.vmem [#allocation2], %s127
          %s129 = smul.u32 32, %s15
          %131 = vsyncadd %s125, 0
          %s132 = smul.addr %s129, 4
          %s133 = scalar_lea.hbm %s0, %s132
          %s134 = sshll.u32 %s133, 4
          %s135 = int_to_ptr.hbm [resolvable:$true] %s134
          %s136 = sshll.u32 %s128, 4
          %s137 = int_to_ptr.vmem [resolvable:$true] %s136
          %142 = dma.hbm_to_vmem [thread:$0]  %s135, 2048, %s137, %s125, 64, 64, 4
        $region24: #{tpu_custom_call.1} parent=19 // pred_fallthru
          _
      $region20: #{tpu_custom_call.1} parent=5 // pred_fallthru
        _
      %p143 = scmp.le.s32.totalorder 1, %s15
      %p144 = scmp.lt.s32.totalorder %s15, 3
      %p145 = pnand %p143, %p144
      %p146 = pneg %p145
      // Predicated region
      $region25: #{tpu_custom_call.1} parent=5 // pred_check
        _
      $region26: #{tpu_custom_call.1} parent=5 // pred_check_branch
        %148 = sbr.rel (%p145) target = $region28
      $region27: #{tpu_custom_call.1} parent=5 // pred_region
        %s149 = ssub.s32 %s15, 1
        %s150 = sand.u32 %s28, 1
        %s151 = scalar_lea.sflag [#allocation3], %s150
        %s152 = sand.u32 %s28, 1
        %s153 = smul.addr %s152, 128
        %s154 = scalar_lea.vmem [#allocation2], %s153
        // Predicated region
        $region29: #{tpu_custom_call.1} parent=27 // pred_check
          %p155 = pneg %p41
        $region30: #{tpu_custom_call.1} parent=27 // pred_check_branch
          %157 = sbr.rel (%p155) target = $region32
        $region31: #{tpu_custom_call.1} parent=27 // pred_region
          %159 = dma.done %s151, 2048
        $region32: #{tpu_custom_call.1} parent=27 // pred_fallthru
          _
        // Predicated region
        $region33: #{tpu_custom_call.1} parent=27 // pred_check
          %p160 = pneg %p62
        $region34: #{tpu_custom_call.1} parent=27 // pred_check_branch
          %162 = sbr.rel (%p160) target = $region36
        $region35: #{tpu_custom_call.1} parent=27 // pred_region
          %164 = dma.done [#allocation6], 1024
        $region36: #{tpu_custom_call.1} parent=27 // pred_fallthru
          _
        %s165 = sand.u32 %s28, 1
        %s166 = scalar_lea.sflag [#allocation3], %s165
        %s167 = sand.u32 %s28, 1
        %s168 = smul.addr %s167, 128
        %s169 = scalar_lea.vmem [#allocation2], %s168
        %p170 = pneg %p41
        %p171 = pneg %p38
        %p172 = pneg %p62
        %p173 = pneg %p59
        %p174 = pneg %p88
        %p175 = pneg %p85
        %s176 = sand.u32 %s75, 1
        %s177 = scalar_lea.sflag [#allocation4], %s176
        %s178 = sand.u32 %s75, 1
        %s179 = smul.addr %s178, 128
        %s180 = scalar_lea.vmem [#allocation7], %s179
        %s181 = smul.u32 32, %s20
        %s182 = smul.u32 32, %s20
        %v183 = vld [vmem:[%s154] sm:$0xf]
        %v184 = vld [vmem:[%s154 + $0x4] sm:$0xf]
        %v185 = vld [vmem:[%s154 + $0x8] sm:$0xf]
        %v186 = vld [vmem:[%s154 + $0xc] sm:$0xf]
        %v187 = vld [vmem:[%s154 + $0x10] sm:$0xf]
        %v188 = vld [vmem:[%s154 + $0x14] sm:$0xf]
        %v189 = vld [vmem:[%s154 + $0x18] sm:$0xf]
        %v190 = vld [vmem:[%s154 + $0x1c] sm:$0xf]
        %v191 = vld [vmem:[%s154 + $0x20] sm:$0xf]
        %v192 = vld [vmem:[%s154 + $0x24] sm:$0xf]
        %v193 = vld [vmem:[%s154 + $0x28] sm:$0xf]
        %v194 = vld [vmem:[%s154 + $0x2c] sm:$0xf]
        %v195 = vld [vmem:[%s154 + $0x30] sm:$0xf]
        %v196 = vld [vmem:[%s154 + $0x34] sm:$0xf]
        %v197 = vld [vmem:[%s154 + $0x38] sm:$0xf]
        %v198 = vld [vmem:[%s154 + $0x3c] sm:$0xf]
        %v199 = vld [vmem:[%s154 + $0x40] sm:$0xf]
        %v200 = vld [vmem:[%s154 + $0x44] sm:$0xf]
        %v201 = vld [vmem:[%s154 + $0x48] sm:$0xf]
        %v202 = vld [vmem:[%s154 + $0x4c] sm:$0xf]
        %v203 = vld [vmem:[%s154 + $0x50] sm:$0xf]
        %v204 = vld [vmem:[%s154 + $0x54] sm:$0xf]
        %v205 = vld [vmem:[%s154 + $0x58] sm:$0xf]
        %v206 = vld [vmem:[%s154 + $0x5c] sm:$0xf]
        %v207 = vld [vmem:[%s154 + $0x60] sm:$0xf]
        %v208 = vld [vmem:[%s154 + $0x64] sm:$0xf]
        %v209 = vld [vmem:[%s154 + $0x68] sm:$0xf]
        %v210 = vld [vmem:[%s154 + $0x6c] sm:$0xf]
        %v211 = vld [vmem:[%s154 + $0x70] sm:$0xf]
        %v212 = vld [vmem:[%s154 + $0x74] sm:$0xf]
        %v213 = vld [vmem:[%s154 + $0x78] sm:$0xf]
        %v214 = vld [vmem:[%s154 + $0x7c] sm:$0xf]
        %v215 = vld [vmem:[#allocation5] sm:$0xf]
        %v216 = vld [vmem:[#allocation5 + $0x4] sm:$0xf]
        %v217 = vld [vmem:[#allocation5 + $0x8] sm:$0xf]
        %v218 = vld [vmem:[#allocation5 + $0xc] sm:$0xf]
        %v219 = vld [vmem:[#allocation5 + $0x10] sm:$0xf]
        %v220 = vld [vmem:[#allocation5 + $0x14] sm:$0xf]
        %v221 = vld [vmem:[#allocation5 + $0x18] sm:$0xf]
        %v222 = vld [vmem:[#allocation5 + $0x1c] sm:$0xf]
        %v223 = vld [vmem:[#allocation5 + $0x20] sm:$0xf]
        %v224 = vld [vmem:[#allocation5 + $0x24] sm:$0xf]
        %v225 = vld [vmem:[#allocation5 + $0x28] sm:$0xf]
        %v226 = vld [vmem:[#allocation5 + $0x2c] sm:$0xf]
        %v227 = vld [vmem:[#allocation5 + $0x30] sm:$0xf]
        %v228 = vld [vmem:[#allocation5 + $0x34] sm:$0xf]
        %v229 = vld [vmem:[#allocation5 + $0x38] sm:$0xf]
        %v230 = vld [vmem:[#allocation5 + $0x3c] sm:$0xf]
        %v263 = vunpack.c.l.b16 %v183
        %v264 = vunpack.c.l.b16 %v184
        %v265 = vunpack.c.l.b16 %v185
        %v266 = vunpack.c.l.b16 %v186
        %v267 = vunpack.c.l.b16 %v187
        %v268 = vunpack.c.l.b16 %v188
        %v269 = vunpack.c.l.b16 %v189
        %v270 = vunpack.c.l.b16 %v190
        %v271 = vunpack.c.l.b16 %v191
        %v272 = vunpack.c.l.b16 %v192
        %v273 = vunpack.c.l.b16 %v193
        %v274 = vunpack.c.l.b16 %v194
        %v275 = vunpack.c.l.b16 %v195
        %v276 = vunpack.c.l.b16 %v196
        %v277 = vunpack.c.l.b16 %v197
        %v278 = vunpack.c.l.b16 %v198
        %v279 = vunpack.c.l.b16 %v199
        %v280 = vunpack.c.l.b16 %v200
        %v281 = vunpack.c.l.b16 %v201
        %v282 = vunpack.c.l.b16 %v202
        %v283 = vunpack.c.l.b16 %v203
        %v284 = vunpack.c.l.b16 %v204
        %v285 = vunpack.c.l.b16 %v205
        %v286 = vunpack.c.l.b16 %v206
        %v287 = vunpack.c.l.b16 %v207
        %v288 = vunpack.c.l.b16 %v208
        %v289 = vunpack.c.l.b16 %v209
        %v290 = vunpack.c.l.b16 %v210
        %v291 = vunpack.c.l.b16 %v211
        %v292 = vunpack.c.l.b16 %v212
        %v293 = vunpack.c.l.b16 %v213
        %v294 = vunpack.c.l.b16 %v214
        %v295 = vpack.c.b16 %v264, %v263
        %v296 = vpack.c.b16 %v266, %v265
        %v297 = vpack.c.b16 %v268, %v267
        %v298 = vpack.c.b16 %v270, %v269
        %v299 = vpack.c.b16 %v272, %v271
        %v300 = vpack.c.b16 %v274, %v273
        %v301 = vpack.c.b16 %v276, %v275
        %v302 = vpack.c.b16 %v278, %v277
        %v303 = vpack.c.b16 %v280, %v279
        %v304 = vpack.c.b16 %v282, %v281
        %v305 = vpack.c.b16 %v284, %v283
        %v306 = vpack.c.b16 %v286, %v285
        %v307 = vpack.c.b16 %v288, %v287
        %v308 = vpack.c.b16 %v290, %v289
        %v309 = vpack.c.b16 %v292, %v291
        %v310 = vpack.c.b16 %v294, %v293
        %v343 = vunpack.c.l.b16 %v215
        %v344 = vunpack.c.l.b16 %v216
        %v345 = vunpack.c.l.b16 %v217
        %v346 = vunpack.c.l.b16 %v218
        %v347 = vunpack.c.l.b16 %v219
        %v348 = vunpack.c.l.b16 %v220
        %v349 = vunpack.c.l.b16 %v221
        %v350 = vunpack.c.l.b16 %v222
        %v351 = vunpack.c.l.b16 %v223
        %v352 = vunpack.c.l.b16 %v224
        %v353 = vunpack.c.l.b16 %v225
        %v354 = vunpack.c.l.b16 %v226
        %v355 = vunpack.c.l.b16 %v227
        %v356 = vunpack.c.l.b16 %v228
        %v357 = vunpack.c.l.b16 %v229
        %v358 = vunpack.c.l.b16 %v230
        %v359 = vpack.c.b16 %v344, %v343
        %v360 = vpack.c.b16 %v346, %v345
        %v361 = vpack.c.b16 %v348, %v347
        %v362 = vpack.c.b16 %v350, %v349
        %v363 = vpack.c.b16 %v352, %v351
        %v364 = vpack.c.b16 %v354, %v353
        %v365 = vpack.c.b16 %v356, %v355
        %v366 = vpack.c.b16 %v358, %v357
        %375 = vmatpush.bf16.msra.mxu0 %v366
        %376 = vmatpush.bf16.msra.mxu0 %v365
        %377 = vmatpush.bf16.msra.mxu0 %v364
        %378 = vmatpush.bf16.msra.mxu0 %v363
        %379 = vmatpush.bf16.msra.mxu0 %v362
        %380 = vmatpush.bf16.msra.mxu0 %v361
        %381 = vmatpush.bf16.msra.mxu0 %v360
        %382 = vmatpush.bf16.msra.mxu0 %v359
        %383 = vmatmul.bf16.gmra.mxu0 %v295
        %v384 = vpop.f32.mrf.mxu0
        %v385 = vadd.f32 0.0, %v384
        %v386 = vpop.f32.mrf.mxu0
        %v387 = vadd.f32 0.0, %v386
        %388 = vmatmul.bf16.gmra.mxu0 %v296
        %v389 = vpop.f32.mrf.mxu0
        %v390 = vadd.f32 0.0, %v389
        %v391 = vpop.f32.mrf.mxu0
        %v392 = vadd.f32 0.0, %v391
        %393 = vmatmul.bf16.gmra.mxu0 %v297
        %v394 = vpop.f32.mrf.mxu0
        %v395 = vadd.f32 0.0, %v394
        %v396 = vpop.f32.mrf.mxu0
        %v397 = vadd.f32 0.0, %v396
        %398 = vmatmul.bf16.gmra.mxu0 %v298
        %v399 = vpop.f32.mrf.mxu0
        %v400 = vadd.f32 0.0, %v399
        %v401 = vpop.f32.mrf.mxu0
        %v402 = vadd.f32 0.0, %v401
        %403 = vmatmul.bf16.gmra.mxu0 %v299
        %v404 = vpop.f32.mrf.mxu0
        %v405 = vadd.f32 0.0, %v404
        %v406 = vpop.f32.mrf.mxu0
        %v407 = vadd.f32 0.0, %v406
        %408 = vmatmul.bf16.gmra.mxu0 %v300
        %v409 = vpop.f32.mrf.mxu0
        %v410 = vadd.f32 0.0, %v409
        %v411 = vpop.f32.mrf.mxu0
        %v412 = vadd.f32 0.0, %v411
        %413 = vmatmul.bf16.gmra.mxu0 %v301
        %v414 = vpop.f32.mrf.mxu0
        %v415 = vadd.f32 0.0, %v414
        %v416 = vpop.f32.mrf.mxu0
        %v417 = vadd.f32 0.0, %v416
        %418 = vmatmul.bf16.gmra.mxu0 %v302
        %v419 = vpop.f32.mrf.mxu0
        %v420 = vadd.f32 0.0, %v419
        %v421 = vpop.f32.mrf.mxu0
        %v422 = vadd.f32 0.0, %v421
        %423 = vmatmul.bf16.gmra.mxu0 %v303
        %v424 = vpop.f32.mrf.mxu0
        %v425 = vadd.f32 0.0, %v424
        %v426 = vpop.f32.mrf.mxu0
        %v427 = vadd.f32 0.0, %v426
        %428 = vmatmul.bf16.gmra.mxu0 %v304
        %v429 = vpop.f32.mrf.mxu0
        %v430 = vadd.f32 0.0, %v429
        %v431 = vpop.f32.mrf.mxu0
        %v432 = vadd.f32 0.0, %v431
        %433 = vmatmul.bf16.gmra.mxu0 %v305
        %v434 = vpop.f32.mrf.mxu0
        %v435 = vadd.f32 0.0, %v434
        %v436 = vpop.f32.mrf.mxu0
        %v437 = vadd.f32 0.0, %v436
        %438 = vmatmul.bf16.gmra.mxu0 %v306
        %v439 = vpop.f32.mrf.mxu0
        %v440 = vadd.f32 0.0, %v439
        %v441 = vpop.f32.mrf.mxu0
        %v442 = vadd.f32 0.0, %v441
        %443 = vmatmul.bf16.gmra.mxu0 %v307
        %v444 = vpop.f32.mrf.mxu0
        %v445 = vadd.f32 0.0, %v444
        %v446 = vpop.f32.mrf.mxu0
        %v447 = vadd.f32 0.0, %v446
        %448 = vmatmul.bf16.gmra.mxu0 %v308
        %v449 = vpop.f32.mrf.mxu0
        %v450 = vadd.f32 0.0, %v449
        %v451 = vpop.f32.mrf.mxu0
        %v452 = vadd.f32 0.0, %v451
        %453 = vmatmul.bf16.gmra.mxu0 %v309
        %v454 = vpop.f32.mrf.mxu0
        %v455 = vadd.f32 0.0, %v454
        %v456 = vpop.f32.mrf.mxu0
        %v457 = vadd.f32 0.0, %v456
        %458 = vmatmul.bf16.gmra.mxu0 %v310
        %v459 = vpop.f32.mrf.mxu0
        %v460 = vadd.f32 0.0, %v459
        %v461 = vpop.f32.mrf.mxu0
        %v462 = vadd.f32 0.0, %v461
        %463 = vdwg.mxu0
        %v464 = vpack.c.bf16 %v385, %v385
        %v465 = vpack.c.bf16 %v387, %v387
        %v466 = vpack.c.bf16 %v390, %v390
        %v467 = vpack.c.bf16 %v392, %v392
        %v468 = vpack.c.bf16 %v395, %v395
        %v469 = vpack.c.bf16 %v397, %v397
        %v470 = vpack.c.bf16 %v400, %v400
        %v471 = vpack.c.bf16 %v402, %v402
        %v472 = vpack.c.bf16 %v405, %v405
        %v473 = vpack.c.bf16 %v407, %v407
        %v474 = vpack.c.bf16 %v410, %v410
        %v475 = vpack.c.bf16 %v412, %v412
        %v476 = vpack.c.bf16 %v415, %v415
        %v477 = vpack.c.bf16 %v417, %v417
        %v478 = vpack.c.bf16 %v420, %v420
        %v479 = vpack.c.bf16 %v422, %v422
        %v480 = vpack.c.bf16 %v425, %v425
        %v481 = vpack.c.bf16 %v427, %v427
        %v482 = vpack.c.bf16 %v430, %v430
        %v483 = vpack.c.bf16 %v432, %v432
        %v484 = vpack.c.bf16 %v435, %v435
        %v485 = vpack.c.bf16 %v437, %v437
        %v486 = vpack.c.bf16 %v440, %v440
        %v487 = vpack.c.bf16 %v442, %v442
        %v488 = vpack.c.bf16 %v445, %v445
        %v489 = vpack.c.bf16 %v447, %v447
        %v490 = vpack.c.bf16 %v450, %v450
        %v491 = vpack.c.bf16 %v452, %v452
        %v492 = vpack.c.bf16 %v455, %v455
        %v493 = vpack.c.bf16 %v457, %v457
        %v494 = vpack.c.bf16 %v460, %v460
        %v495 = vpack.c.bf16 %v462, %v462
        %496 = vst [vmem:[%s180] sm:$0xf] %v464
        %497 = vst [vmem:[%s180 + $0x4] sm:$0xf] %v465
        %498 = vst [vmem:[%s180 + $0x8] sm:$0xf] %v466
        %499 = vst [vmem:[%s180 + $0xc] sm:$0xf] %v467
        %500 = vst [vmem:[%s180 + $0x10] sm:$0xf] %v468
        %501 = vst [vmem:[%s180 + $0x14] sm:$0xf] %v469
        %502 = vst [vmem:[%s180 + $0x18] sm:$0xf] %v470
        %503 = vst [vmem:[%s180 + $0x1c] sm:$0xf] %v471
        %504 = vst [vmem:[%s180 + $0x20] sm:$0xf] %v472
        %505 = vst [vmem:[%s180 + $0x24] sm:$0xf] %v473
        %506 = vst [vmem:[%s180 + $0x28] sm:$0xf] %v474
        %507 = vst [vmem:[%s180 + $0x2c] sm:$0xf] %v475
        %508 = vst [vmem:[%s180 + $0x30] sm:$0xf] %v476
        %509 = vst [vmem:[%s180 + $0x34] sm:$0xf] %v477
        %510 = vst [vmem:[%s180 + $0x38] sm:$0xf] %v478
        %511 = vst [vmem:[%s180 + $0x3c] sm:$0xf] %v479
        %512 = vst [vmem:[%s180 + $0x40] sm:$0xf] %v480
        %513 = vst [vmem:[%s180 + $0x44] sm:$0xf] %v481
        %514 = vst [vmem:[%s180 + $0x48] sm:$0xf] %v482
        %515 = vst [vmem:[%s180 + $0x4c] sm:$0xf] %v483
        %516 = vst [vmem:[%s180 + $0x50] sm:$0xf] %v484
        %517 = vst [vmem:[%s180 + $0x54] sm:$0xf] %v485
        %518 = vst [vmem:[%s180 + $0x58] sm:$0xf] %v486
        %519 = vst [vmem:[%s180 + $0x5c] sm:$0xf] %v487
        %520 = vst [vmem:[%s180 + $0x60] sm:$0xf] %v488
        %521 = vst [vmem:[%s180 + $0x64] sm:$0xf] %v489
        %522 = vst [vmem:[%s180 + $0x68] sm:$0xf] %v490
        %523 = vst [vmem:[%s180 + $0x6c] sm:$0xf] %v491
        %524 = vst [vmem:[%s180 + $0x70] sm:$0xf] %v492
        %525 = vst [vmem:[%s180 + $0x74] sm:$0xf] %v493
        %526 = vst [vmem:[%s180 + $0x78] sm:$0xf] %v494
        %527 = vst [vmem:[%s180 + $0x7c] sm:$0xf] %v495
        %s528 = sand.u32 %s75, 1
        %s529 = scalar_lea.sflag [#allocation4], %s528
        %s530 = sand.u32 %s75, 1
        %s531 = smul.addr %s530, 128
        %s532 = scalar_lea.vmem [#allocation7], %s531
        // Predicated region
        $region37: #{tpu_custom_call.1} parent=27 // pred_check
          %p533 = pneg %p85
        $region38: #{tpu_custom_call.1} parent=27 // pred_check_branch
          %535 = sbr.rel (%p533) target = $region40
        $region39: #{tpu_custom_call.1} parent=27 // pred_region
          %s536 = smul.u32 32, %s20
          %538 = vsyncadd %s529, 0
          %s539 = smul.addr %s536, 4
          %s540 = scalar_lea.hbm %s2, %s539
          %s541 = sshll.u32 %s532, 4
          %s542 = int_to_ptr.vmem [resolvable:$true] %s541
          %s543 = sshll.u32 %s540, 4
          %s544 = int_to_ptr.hbm [resolvable:$true] %s543
          %549 = dma.vmem_to_hbm [thread:$0]  %s542, 2048, %s544, %s529, 64, 64, 4
        $region40: #{tpu_custom_call.1} parent=27 // pred_fallthru
          _
      $region28: #{tpu_custom_call.1} parent=5 // pred_fallthru
        _
      %p550 = scmp.le.s32.totalorder 2, %s15
      // Predicated region
      $region41: #{tpu_custom_call.1} parent=5 // pred_check
        %p551 = pneg %p550
      $region42: #{tpu_custom_call.1} parent=5 // pred_check_branch
        %553 = sbr.rel (%p551) target = $region44
      $region43: #{tpu_custom_call.1} parent=5 // pred_region
        %s554 = ssub.s32 %s15, 2
        // Predicated region
        $region45: #{tpu_custom_call.1} parent=43 // pred_check
          %p555 = pneg %p91
        $region46: #{tpu_custom_call.1} parent=43 // pred_check_branch
          %557 = sbr.rel (%p555) target = $region48
        $region47: #{tpu_custom_call.1} parent=43 // pred_region
          %s558 = sand.u32 %s76, 1
          %s559 = scalar_lea.sflag [#allocation4], %s558
          %s560 = sand.u32 %s76, 1
          %s561 = smul.addr %s560, 128
          %s562 = scalar_lea.vmem [#allocation7], %s561
          %564 = dma.done %s559, 2048
        $region48: #{tpu_custom_call.1} parent=43 // pred_fallthru
          _
      $region44: #{tpu_custom_call.1} parent=5 // pred_fallthru
        _
    $region6: #{tpu_custom_call.1} parent=1 // loop_footer
      %s19 = sadd.s32 1, %s15
    $region7: #{tpu_custom_call.1} parent=1 // loop_footer_branch
      %14 = sbr.rel target = $region3
    $region8: #{tpu_custom_call.1} parent=1 // loop_exit
      _
    %565 = vsyncpa [#allocation3], 1
    %s566 = scalar_lea.sflag [#allocation3], 1
    %567 = vsyncpa %s566, 1
    %568 = vsyncpa [#allocation6], 1
    %569 = vsyncpa [#allocation4], 1
    %s570 = scalar_lea.sflag [#allocation4], 1
    %571 = vsyncpa %s570, 1

</llo_original>
